<compile_context>
chip_gen: v7x
topology: tpu7x:2x2x1
jax: 0.10.0
libtpu: 0.0.40
codegen_flags: <defaults>
</compile_context>

<pallas_src>
import functools

import jax
import jax.numpy as jnp
from jax.experimental import pallas as pl
from jax.experimental.pallas import tpu as pltpu

# Sobel kernels (only used by the pure-JAX reference; the Pallas path uses the
# exact constant-An identity described above).
_KX = ((-1.0, 0.0, 1.0), (-2.0, 0.0, 2.0), (-1.0, 0.0, 1.0))
_KY = ((-1.0, -2.0, -1.0), (0.0, 0.0, 0.0), (1.0, 2.0, 1.0))


# --------------------------------------------------------------------------
# Pallas kernel: three channel-mixing matmuls + 2 ReLUs on a lane-dense tile.
# --------------------------------------------------------------------------
def _gcn_channel_mix_kernel(x_ref, m1_ref, m2_ref, m3_ref, o_ref):
    # x_ref : (K, HW)  channel-major tile (K = C, or B*C in the folded layout)
    # m*_ref: (K, K)   mixing matrices with the constant normalized adjacency
    #                  already folded in (M_i = W_i @ An, block-diag per batch)
    x = x_ref[...]
    y = jnp.maximum(jnp.dot(m1_ref[...], x, preferred_element_type=jnp.float32), 0.0)
    y = jnp.maximum(jnp.dot(m2_ref[...], y, preferred_element_type=jnp.float32), 0.0)
    o_ref[...] = jnp.dot(m3_ref[...], y, preferred_element_type=jnp.float32)


# --------------------------------------------------------------------------
# Wrapper
# --------------------------------------------------------------------------
def _fold_adjacency(wm, c):
    """W @ An with An = 0.5 * (I + J/C), in closed form (no matmul needed)."""
    return 0.5 * wm + (0.5 / c) * jnp.sum(wm, axis=1, keepdims=True)


@functools.partial(jax.jit, static_argnames=("fold_batch",))
def gcn_spatial_forward(x, w1, w2, w3, *, fold_batch: bool = True):
    b, c, h, w = x.shape
    hw = h * w

    # Fold the (constant) normalized adjacency into the 1x1-conv weights:
    #   W @ (An @ X) == (W @ An) @ X   -> halves the HW-wide matmuls (6 -> 3).
    m1 = _fold_adjacency(w1.astype(jnp.float32), c)
    m2 = _fold_adjacency(w2.astype(jnp.float32), c)
    m3 = _fold_adjacency(w3.astype(jnp.float32), c)

    # Lane-dense layout at the pallas_call boundary: last dim = H*W (multiple
    # of 128 here), so in-kernel loads/stores are unmasked and there are no
    # in-kernel reshapes crossing (8,128) tiles.
    x2 = x.astype(jnp.float32).reshape(b, c, hw)

    if fold_batch:
        # Single grid step: stack batch along the sublane axis -> (B*C, HW)
        # tile; the per-batch channel matmul becomes one block-diagonal matmul
        # (kron(I_B, M_i)).  Best for single-TensorCore chips (v5e / v6e).
        bc = b * c
        eye_b = jnp.eye(b, dtype=jnp.float32)
        mm1 = jnp.kron(eye_b, m1)
        mm2 = jnp.kron(eye_b, m2)
        mm3 = jnp.kron(eye_b, m3)
        out = pl.pallas_call(
            _gcn_channel_mix_kernel,
            out_shape=jax.ShapeDtypeStruct((bc, hw), jnp.float32),
            grid_spec=pltpu.PrefetchScalarGridSpec(
                num_scalar_prefetch=0,
                grid=(1,),
                in_specs=[
                    pl.BlockSpec((bc, hw), lambda i: (0, 0)),
                    pl.BlockSpec((bc, bc), lambda i: (0, 0)),
                    pl.BlockSpec((bc, bc), lambda i: (0, 0)),
                    pl.BlockSpec((bc, bc), lambda i: (0, 0)),
                ],
                out_specs=pl.BlockSpec((bc, hw), lambda i: (0, 0)),
            ),
            compiler_params=pltpu.CompilerParams(
                dimension_semantics=("arbitrary",)),
        )(x2.reshape(bc, hw), mm1, mm2, mm3)
        return out.reshape(b, c, h, w)

    # Batch grid: one batch element per step, marked "parallel" so the two
    # v7x TensorCores each take part of the batch.  Blocks stay lane-dense.
    out = pl.pallas_call(
        _gcn_channel_mix_kernel,
        out_shape=jax.ShapeDtypeStruct((b, c, hw), jnp.float32),
        grid_spec=pltpu.PrefetchScalarGridSpec(
            num_scalar_prefetch=0,
            grid=(b,),
            in_specs=[
                pl.BlockSpec((None, c, hw), lambda i: (i, 0, 0)),
                pl.BlockSpec((c, c), lambda i: (0, 0)),
                pl.BlockSpec((c, c), lambda i: (0, 0)),
                pl.BlockSpec((c, c), lambda i: (0, 0)),
            ],
            out_specs=pl.BlockSpec((None, c, hw), lambda i: (i, 0, 0)),
        ),
        compiler_params=pltpu.CompilerParams(
            dimension_semantics=("parallel",)),
    )(x2, m1, m2, m3)
    return out.reshape(b, c, h, w)


def _prefer_folded_batch() -> bool:
    """Collapse the batch grid on single-TensorCore chips (v5e / v6e);
    keep a parallel batch grid on multi-TensorCore chips (v7x)."""
    try:
        kind = jax.devices()[0].device_kind.lower()
    except Exception:
        return True
    return "v7" not in kind   # v7x has 2 TensorCores per chip


# --------------------------------------------------------------------------
# Pure-JAX reference mirroring the PyTorch module (full Sobel / softmax /
# normalize path) — used to validate that the constant-An folding is exact.
# --------------------------------------------------------------------------
def _reference_forward(x, w1, w2, w3):
    b, c, h, w = x.shape
    kx = jnp.array(_KX, jnp.float32)
    ky = jnp.array(_KY, jnp.float32)
    wx = jnp.broadcast_to(kx, (c, c, 3, 3))
    wy = jnp.broadcast_to(ky, (c, c, 3, 3))
    dn = ("NCHW", "OIHW", "NCHW")
    sx = jnp.abs(jax.lax.conv_general_dilated(x, wx, (1, 1), "SAME",
                                              dimension_numbers=dn))
    sy = jnp.abs(jax.lax.conv_general_dilated(x, wy, (1, 1), "SAME",
                                              dimension_numbers=dn))
    sxm = sx.reshape(b, c, h * w)
    sym = sy.reshape(b, c, h * w).transpose(0, 2, 1)
    A = jnp.einsum("bck,bkd->bcd", sxm, sym)
    A = jax.nn.softmax(A, axis=-1)
    A1 = A + jnp.eye(c, dtype=jnp.float32)[None]
    d = A1.sum(axis=2)
    dinv = d ** -0.5
    An = dinv[:, :, None] * A1 * dinv[:, None, :]
    X = x.reshape(b, c, h * w)
    y = jax.nn.relu(jnp.einsum("oc,bcn->bon", w1,
                               jnp.einsum("bcd,bdn->bcn", An, X)))
    y = jax.nn.relu(jnp.einsum("oc,bcn->bon", w2,
                               jnp.einsum("bcd,bdn->bcn", An, y)))
    y = jnp.einsum("oc,bcn->bon", w3,
                   jnp.einsum("bcd,bdn->bcn", An, y))
    return y.reshape(b, c, h, w)


if __name__ == "__main__":
    B, C, H, W = 2, 4, 16, 16    # small shapes consistent with the module

    key = jax.random.PRNGKey(0)
    kx_, k1, k2, k3 = jax.random.split(key, 4)

    x = jax.random.normal(kx_, (B, C, H, W), jnp.float32)
    # Conv1d(C, C, kernel_size=1, bias=False) weights -> (C, C) matrices.
    scale = 1.0 / jnp.sqrt(jnp.float32(C))
    w1 = jax.random.normal(k1, (C, C), jnp.float32) * scale
    w2 = jax.random.normal(k2, (C, C), jnp.float32) * scale
    w3 = jax.random.normal(k3, (C, C), jnp.float32) * scale

    ref = _reference_forward(x, w1, w2, w3)

    # Run the chip-preferred path, then also validate the other path so both
    # layouts are known-good on this device.
    preferred = _prefer_folded_batch()
    out = jax.block_until_ready(
        gcn_spatial_forward(x, w1, w2, w3, fold_batch=preferred))
    assert out.shape == (B, C, H, W)
    assert jnp.allclose(out, ref, rtol=1e-4, atol=1e-4), \
        f"max abs err (fold_batch={preferred}) = {jnp.max(jnp.abs(out - ref))}"

    out2 = jax.block_until_ready(
        gcn_spatial_forward(x, w1, w2, w3, fold_batch=not preferred))
    assert jnp.allclose(out2, ref, rtol=1e-4, atol=1e-4), \
        f"max abs err (fold_batch={not preferred}) = {jnp.max(jnp.abs(out2 - ref))}"

    print("KERNEL_OK")
</pallas_src>

<mosaic_0001>
module attributes {stable_mosaic.version = 11 : i64} {
  func.func @_gcn_channel_mix_kernel(%arg0: i32, %arg1: memref<8x256xf32, #tpu.memory_space<vmem>>, %arg2: memref<8x8xf32, #tpu.memory_space<vmem>>, %arg3: memref<8x8xf32, #tpu.memory_space<vmem>>, %arg4: memref<8x8xf32, #tpu.memory_space<vmem>>, %arg5: memref<8x256xf32, #tpu.memory_space<vmem>>) attributes {dimension_semantics = [#tpu.dimension_semantics<arbitrary>], iteration_bounds = array<i64: 1>, scalar_prefetch = 0 : i64, scratch_operands = 0 : i64, tpu.core_type = #tpu.core_type<tc>, window_params = [{pipeline_mode = #tpu.pipeline_mode<synchronous>, transform_indices = @transform_0, window_bounds = array<i64: 8, 256>}, {pipeline_mode = #tpu.pipeline_mode<synchronous>, transform_indices = @transform_1, window_bounds = array<i64: 8, 8>}, {pipeline_mode = #tpu.pipeline_mode<synchronous>, transform_indices = @transform_2, window_bounds = array<i64: 8, 8>}, {pipeline_mode = #tpu.pipeline_mode<synchronous>, transform_indices = @transform_3, window_bounds = array<i64: 8, 8>}, {pipeline_mode = #tpu.pipeline_mode<synchronous>, transform_indices = @transform_4, window_bounds = array<i64: 8, 256>}]} {
    %c0 = arith.constant 0 : index
    %c0_0 = arith.constant 0 : index
    %0 = vector.load %arg1[%c0, %c0_0] : memref<8x256xf32, #tpu.memory_space<vmem>>, vector<8x256xf32>
    %c0_1 = arith.constant 0 : index
    %c0_2 = arith.constant 0 : index
    %1 = vector.load %arg2[%c0_1, %c0_2] : memref<8x8xf32, #tpu.memory_space<vmem>>, vector<8x8xf32>
    %cst = arith.constant dense<0.000000e+00> : vector<8x256xf32>
    %2 = tpu.matmul %1, %0, %cst {dimension_numbers = #tpu.dot_dimension_numbers<[1], [0], [0], [1], [0, 0, 1, 1], [], []>} : vector<8x8xf32>, vector<8x256xf32>, vector<8x256xf32> -> vector<8x256xf32>
    %cst_3 = arith.constant 0.000000e+00 : f32
    %3 = vector.broadcast %cst_3 : f32 to vector<8x256xf32>
    %4 = arith.maximumf %2, %3 : vector<8x256xf32>
    %c0_4 = arith.constant 0 : index
    %c0_5 = arith.constant 0 : index
    %5 = vector.load %arg3[%c0_4, %c0_5] : memref<8x8xf32, #tpu.memory_space<vmem>>, vector<8x8xf32>
    %cst_6 = arith.constant dense<0.000000e+00> : vector<8x256xf32>
    %6 = tpu.matmul %5, %4, %cst_6 {dimension_numbers = #tpu.dot_dimension_numbers<[1], [0], [0], [1], [0, 0, 1, 1], [], []>} : vector<8x8xf32>, vector<8x256xf32>, vector<8x256xf32> -> vector<8x256xf32>
    %cst_7 = arith.constant 0.000000e+00 : f32
    %7 = vector.broadcast %cst_7 : f32 to vector<8x256xf32>
    %8 = arith.maximumf %6, %7 : vector<8x256xf32>
    %c0_8 = arith.constant 0 : index
    %c0_9 = arith.constant 0 : index
    %9 = vector.load %arg4[%c0_8, %c0_9] : memref<8x8xf32, #tpu.memory_space<vmem>>, vector<8x8xf32>
    %cst_10 = arith.constant dense<0.000000e+00> : vector<8x256xf32>
    %10 = tpu.matmul %9, %8, %cst_10 {dimension_numbers = #tpu.dot_dimension_numbers<[1], [0], [0], [1], [0, 0, 1, 1], [], []>} : vector<8x8xf32>, vector<8x256xf32>, vector<8x256xf32> -> vector<8x256xf32>
    %c0_11 = arith.constant 0 : index
    %c0_12 = arith.constant 0 : index
    %11 = vector.load %arg5[%c0_11, %c0_12] : memref<8x256xf32, #tpu.memory_space<vmem>>, vector<8x256xf32>
    tpu.vector_store %arg5[%c0_11, %c0_12], %10 {strides = array<i32>} : memref<8x256xf32, #tpu.memory_space<vmem>>, vector<8x256xf32>,
    return
  }
  func.func @transform_0(%arg0: i32) -> (i32, i32) {
    %c0_i32 = arith.constant 0 : i32
    %c0_i32_0 = arith.constant 0 : i32
    %c0_i32_1 = arith.constant 0 : i32
    return %c0_i32, %c0_i32_0 : i32, i32
  }
  func.func @transform_1(%arg0: i32) -> (i32, i32) {
    %c0_i32 = arith.constant 0 : i32
    %c0_i32_0 = arith.constant 0 : i32
    %c0_i32_1 = arith.constant 0 : i32
    return %c0_i32, %c0_i32_0 : i32, i32
  }
  func.func @transform_2(%arg0: i32) -> (i32, i32) {
    %c0_i32 = arith.constant 0 : i32
    %c0_i32_0 = arith.constant 0 : i32
    %c0_i32_1 = arith.constant 0 : i32
    return %c0_i32, %c0_i32_0 : i32, i32
  }
  func.func @transform_3(%arg0: i32) -> (i32, i32) {
    %c0_i32 = arith.constant 0 : i32
    %c0_i32_0 = arith.constant 0 : i32
    %c0_i32_1 = arith.constant 0 : i32
    return %c0_i32, %c0_i32_0 : i32, i32
  }
  func.func @transform_4(%arg0: i32) -> (i32, i32) {
    %c0_i32 = arith.constant 0 : i32
    %c0_i32_0 = arith.constant 0 : i32
    %c0_i32_1 = arith.constant 0 : i32
    return %c0_i32, %c0_i32_0 : i32, i32
  }
}

</mosaic_0001>

<llo_original>
// kernel: gcn_spatial_forward.1
$region0: #{gcn_spatial_forward.1}
  #allocation0 [shape = 'u32[]', space=smem, size = 0x4, offset = 0x4, fixed_abs, tag = 'smem constant byte address 0x4 - core index']
  #allocation1 [shape = 'u32[144,128]{1,0:T(1,128)}', space=vmem, size = 0x12000, scoped, tag = 'internal scratch']
  %s0 = inlined_call_operand.vmem [shape: f32[8,256], index: 0, kind: input, shape index: {}]
  %s1 = inlined_call_operand.vmem [shape: f32[8,8], index: 1, kind: input, shape index: {}]
  %s2 = inlined_call_operand.vmem [shape: f32[8,8], index: 2, kind: input, shape index: {}]
  %s3 = inlined_call_operand.vmem [shape: f32[8,8], index: 3, kind: input, shape index: {}]
  %s4 = inlined_call_operand.vmem [shape: f32[8,256], index: 4, kind: output, shape index: {}]
  %s5 = sld [smem:[#allocation0]]
  $region26: #{gcn_spatial_forward.1} parent=0
    _
  %s7 = ssub.s32 1, %s5
  %s8 = scalar_select 0, %s7, %s5
  // Predicated region
  $region2: #{gcn_spatial_forward.1} parent=0 // pred_check
    _
  $region3: #{gcn_spatial_forward.1} parent=0 // pred_check_branch
    %10 = sbr.rel (0) target = $region5
  $region4: #{gcn_spatial_forward.1} parent=0 // pred_region
    _
  $region5: #{gcn_spatial_forward.1} parent=0 // pred_fallthru
    _
  // Predicated region
  $region6: #{gcn_spatial_forward.1} parent=0 // pred_check
    _
  $region7: #{gcn_spatial_forward.1} parent=0 // pred_check_branch
    %12 = sbr.rel (0) target = $region9
  $region8: #{gcn_spatial_forward.1} parent=0 // pred_region
    _
  $region9: #{gcn_spatial_forward.1} parent=0 // pred_fallthru
    _
  // Predicated region
  $region10: #{gcn_spatial_forward.1} parent=0 // pred_check
    _
  $region11: #{gcn_spatial_forward.1} parent=0 // pred_check_branch
    %14 = sbr.rel (0) target = $region13
  $region12: #{gcn_spatial_forward.1} parent=0 // pred_region
    _
  $region13: #{gcn_spatial_forward.1} parent=0 // pred_fallthru
    _
  // Predicated region
  $region14: #{gcn_spatial_forward.1} parent=0 // pred_check
    _
  $region15: #{gcn_spatial_forward.1} parent=0 // pred_check_branch
    %16 = sbr.rel (0) target = $region17
  $region16: #{gcn_spatial_forward.1} parent=0 // pred_region
    _
  $region17: #{gcn_spatial_forward.1} parent=0 // pred_fallthru
    _
  %v17 = vld [vmem:[%s0] sm:$0xff]
  %v18 = vld [vmem:[%s0 + $0x8] sm:$0xff]
  %v19 = vld [vmem:[%s1] sm:$0xff]
  %vm20 = vcmask 64512
  %v22 = vsel %vm20, %v19, 0
  %24 = vmatprep.subr.mxu0 %v18
  %25 = vmatpush1.msra.mxu0 %v17
  %26 = vmatprep.subr.mxu0 0.0
  %27 = vmatpush1.msra.mxu0 0.0
  %28 = vmatprep.subr.mxu0 0.0
  %29 = vmatpush1.msra.mxu0 0.0
  %30 = vmatprep.subr.mxu0 0.0
  %31 = vmatpush1.msra.mxu0 0.0
  %32 = vmatprep.subr.mxu0 0.0
  %33 = vmatpush1.msra.mxu0 0.0
  %34 = vmatprep.subr.mxu0 0.0
  %35 = vmatpush1.msra.mxu0 0.0
  %36 = vmatprep.subr.mxu0 0.0
  %37 = vmatpush1.msra.mxu0 0.0
  %38 = vmatprep.subr.mxu0 0.0
  %39 = vmatpush1.msra.mxu0 0.0
  %40 = vmatprep.subr.mxu0 0.0
  %41 = vmatpush1.msra.mxu0 0.0
  %42 = vmatprep.subr.mxu0 0.0
  %43 = vmatpush1.msra.mxu0 0.0
  %44 = vmatprep.subr.mxu0 0.0
  %45 = vmatpush1.msra.mxu0 0.0
  %46 = vmatprep.subr.mxu0 0.0
  %47 = vmatpush1.msra.mxu0 0.0
  %48 = vmatprep.subr.mxu0 0.0
  %49 = vmatpush1.msra.mxu0 0.0
  %50 = vmatprep.subr.mxu0 0.0
  %51 = vmatpush1.msra.mxu0 0.0
  %52 = vmatprep.subr.mxu0 0.0
  %53 = vmatpush1.msra.mxu0 0.0
  %54 = vmatprep.subr.mxu0 0.0
  %55 = vmatpush1.msra.mxu0 0.0
  %56 = vmatprep.subr.mxu0 0.0
  %57 = vmatpush1.msra.mxu0 0.0
  %58 = vmatprep.subr.mxu0 0.0
  %59 = vmatpush1.msra.mxu0 0.0
  %60 = vmatprep.subr.mxu0 0.0
  %61 = vmatpush1.msra.mxu0 0.0
  %62 = vmatprep.subr.mxu0 0.0
  %63 = vmatpush1.msra.mxu0 0.0
  %64 = vmatprep.subr.mxu0 0.0
  %65 = vmatpush1.msra.mxu0 0.0
  %66 = vmatprep.subr.mxu0 0.0
  %67 = vmatpush1.msra.mxu0 0.0
  %68 = vmatprep.subr.mxu0 0.0
  %69 = vmatpush1.msra.mxu0 0.0
  %70 = vmatprep.subr.mxu0 0.0
  %71 = vmatpush1.msra.mxu0 0.0
  %72 = vmatprep.subr.mxu0 0.0
  %73 = vmatpush1.msra.mxu0 0.0
  %74 = vmatprep.subr.mxu0 0.0
  %75 = vmatpush1.msra.mxu0 0.0
  %76 = vmatprep.subr.mxu0 0.0
  %77 = vmatpush1.msra.mxu0 0.0
  %78 = vmatprep.subr.mxu0 0.0
  %79 = vmatpush1.msra.mxu0 0.0
  %80 = vmatprep.subr.mxu0 0.0
  %81 = vmatpush1.msra.mxu0 0.0
  %82 = vmatprep.subr.mxu0 0.0
  %83 = vmatpush1.msra.mxu0 0.0
  %84 = vmatprep.subr.mxu0 0.0
  %85 = vmatpush1.msra.mxu0 0.0
  %86 = vmatprep.subr.mxu0 0.0
  %87 = vmatpush1.msra.mxu0 0.0
  %88 = vmatprep.mubr.f32.mxu0 0.0
  %89 = vmatmul.mubr.f32.gmra.mrb[0].mxu0 %v22
  %v90 = vpop.f32.mrb[0].mxu0
  %v91 = vadd.f32 0.0, %v90
  %v92 = vpop.f32.mrb[0].mxu0
  %v93 = vadd.f32 0.0, %v92
  %94 = vdwg.mxu0
  %v95 = vmax.f32 %v91, 0.0
  %v96 = vmax.f32 %v93, 0.0
  %v97 = vld [vmem:[%s2] sm:$0xff]
  %v99 = vsel %vm20, %v97, 0
  %101 = vmatprep.subr.mxu0 %v96
  %102 = vmatpush1.msra.mxu0 %v95
  %103 = vmatprep.subr.mxu0 0.0
  %104 = vmatpush1.msra.mxu0 0.0
  %105 = vmatprep.subr.mxu0 0.0
  %106 = vmatpush1.msra.mxu0 0.0
  %107 = vmatprep.subr.mxu0 0.0
  %108 = vmatpush1.msra.mxu0 0.0
  %109 = vmatprep.subr.mxu0 0.0
  %110 = vmatpush1.msra.mxu0 0.0
  %111 = vmatprep.subr.mxu0 0.0
  %112 = vmatpush1.msra.mxu0 0.0
  %113 = vmatprep.subr.mxu0 0.0
  %114 = vmatpush1.msra.mxu0 0.0
  %115 = vmatprep.subr.mxu0 0.0
  %116 = vmatpush1.msra.mxu0 0.0
  %117 = vmatprep.subr.mxu0 0.0
  %118 = vmatpush1.msra.mxu0 0.0
  %119 = vmatprep.subr.mxu0 0.0
  %120 = vmatpush1.msra.mxu0 0.0
  %121 = vmatprep.subr.mxu0 0.0
  %122 = vmatpush1.msra.mxu0 0.0
  %123 = vmatprep.subr.mxu0 0.0
  %124 = vmatpush1.msra.mxu0 0.0
  %125 = vmatprep.subr.mxu0 0.0
  %126 = vmatpush1.msra.mxu0 0.0
  %127 = vmatprep.subr.mxu0 0.0
  %128 = vmatpush1.msra.mxu0 0.0
  %129 = vmatprep.subr.mxu0 0.0
  %130 = vmatpush1.msra.mxu0 0.0
  %131 = vmatprep.subr.mxu0 0.0
  %132 = vmatpush1.msra.mxu0 0.0
  %133 = vmatprep.subr.mxu0 0.0
  %134 = vmatpush1.msra.mxu0 0.0
  %135 = vmatprep.subr.mxu0 0.0
  %136 = vmatpush1.msra.mxu0 0.0
  %137 = vmatprep.subr.mxu0 0.0
  %138 = vmatpush1.msra.mxu0 0.0
  %139 = vmatprep.subr.mxu0 0.0
  %140 = vmatpush1.msra.mxu0 0.0
  %141 = vmatprep.subr.mxu0 0.0
  %142 = vmatpush1.msra.mxu0 0.0
  %143 = vmatprep.subr.mxu0 0.0
  %144 = vmatpush1.msra.mxu0 0.0
  %145 = vmatprep.subr.mxu0 0.0
  %146 = vmatpush1.msra.mxu0 0.0
  %147 = vmatprep.subr.mxu0 0.0
  %148 = vmatpush1.msra.mxu0 0.0
  %149 = vmatprep.subr.mxu0 0.0
  %150 = vmatpush1.msra.mxu0 0.0
  %151 = vmatprep.subr.mxu0 0.0
  %152 = vmatpush1.msra.mxu0 0.0
  %153 = vmatprep.subr.mxu0 0.0
  %154 = vmatpush1.msra.mxu0 0.0
  %155 = vmatprep.subr.mxu0 0.0
  %156 = vmatpush1.msra.mxu0 0.0
  %157 = vmatprep.subr.mxu0 0.0
  %158 = vmatpush1.msra.mxu0 0.0
  %159 = vmatprep.subr.mxu0 0.0
  %160 = vmatpush1.msra.mxu0 0.0
  %161 = vmatprep.subr.mxu0 0.0
  %162 = vmatpush1.msra.mxu0 0.0
  %163 = vmatprep.subr.mxu0 0.0
  %164 = vmatpush1.msra.mxu0 0.0
  %165 = vmatprep.mubr.f32.mxu0 0.0
  %166 = vmatmul.mubr.f32.gmra.mrb[0].mxu0 %v99
  %v167 = vpop.f32.mrb[0].mxu0
  %v168 = vadd.f32 0.0, %v167
  %v169 = vpop.f32.mrb[0].mxu0
  %v170 = vadd.f32 0.0, %v169
  %171 = vdwg.mxu0
  %v172 = vmax.f32 %v168, 0.0
  %v173 = vmax.f32 %v170, 0.0
  %v174 = vld [vmem:[%s3] sm:$0xff]
  %v176 = vsel %vm20, %v174, 0
  %178 = vmatprep.subr.mxu0 %v173
  %179 = vmatpush1.msra.mxu0 %v172
  %180 = vmatprep.subr.mxu0 0.0
  %181 = vmatpush1.msra.mxu0 0.0
  %182 = vmatprep.subr.mxu0 0.0
  %183 = vmatpush1.msra.mxu0 0.0
  %184 = vmatprep.subr.mxu0 0.0
  %185 = vmatpush1.msra.mxu0 0.0
  %186 = vmatprep.subr.mxu0 0.0
  %187 = vmatpush1.msra.mxu0 0.0
  %188 = vmatprep.subr.mxu0 0.0
  %189 = vmatpush1.msra.mxu0 0.0
  %190 = vmatprep.subr.mxu0 0.0
  %191 = vmatpush1.msra.mxu0 0.0
  %192 = vmatprep.subr.mxu0 0.0
  %193 = vmatpush1.msra.mxu0 0.0
  %194 = vmatprep.subr.mxu0 0.0
  %195 = vmatpush1.msra.mxu0 0.0
  %196 = vmatprep.subr.mxu0 0.0
  %197 = vmatpush1.msra.mxu0 0.0
  %198 = vmatprep.subr.mxu0 0.0
  %199 = vmatpush1.msra.mxu0 0.0
  %200 = vmatprep.subr.mxu0 0.0
  %201 = vmatpush1.msra.mxu0 0.0
  %202 = vmatprep.subr.mxu0 0.0
  %203 = vmatpush1.msra.mxu0 0.0
  %204 = vmatprep.subr.mxu0 0.0
  %205 = vmatpush1.msra.mxu0 0.0
  %206 = vmatprep.subr.mxu0 0.0
  %207 = vmatpush1.msra.mxu0 0.0
  %208 = vmatprep.subr.mxu0 0.0
  %209 = vmatpush1.msra.mxu0 0.0
  %210 = vmatprep.subr.mxu0 0.0
  %211 = vmatpush1.msra.mxu0 0.0
  %212 = vmatprep.subr.mxu0 0.0
  %213 = vmatpush1.msra.mxu0 0.0
  %214 = vmatprep.subr.mxu0 0.0
  %215 = vmatpush1.msra.mxu0 0.0
  %216 = vmatprep.subr.mxu0 0.0
  %217 = vmatpush1.msra.mxu0 0.0
  %218 = vmatprep.subr.mxu0 0.0
  %219 = vmatpush1.msra.mxu0 0.0
  %220 = vmatprep.subr.mxu0 0.0
  %221 = vmatpush1.msra.mxu0 0.0
  %222 = vmatprep.subr.mxu0 0.0
  %223 = vmatpush1.msra.mxu0 0.0
  %224 = vmatprep.subr.mxu0 0.0
  %225 = vmatpush1.msra.mxu0 0.0
  %226 = vmatprep.subr.mxu0 0.0
  %227 = vmatpush1.msra.mxu0 0.0
  %228 = vmatprep.subr.mxu0 0.0
  %229 = vmatpush1.msra.mxu0 0.0
  %230 = vmatprep.subr.mxu0 0.0
  %231 = vmatpush1.msra.mxu0 0.0
  %232 = vmatprep.subr.mxu0 0.0
  %233 = vmatpush1.msra.mxu0 0.0
  %234 = vmatprep.subr.mxu0 0.0
  %235 = vmatpush1.msra.mxu0 0.0
  %236 = vmatprep.subr.mxu0 0.0
  %237 = vmatpush1.msra.mxu0 0.0
  %238 = vmatprep.subr.mxu0 0.0
  %239 = vmatpush1.msra.mxu0 0.0
  %240 = vmatprep.subr.mxu0 0.0
  %241 = vmatpush1.msra.mxu0 0.0
  %242 = vmatprep.mubr.f32.mxu0 0.0
  %243 = vmatmul.mubr.f32.gmra.mrb[0].mxu0 %v176
  %v244 = vpop.f32.mrb[0].mxu0
  %v245 = vadd.f32 0.0, %v244
  %v246 = vpop.f32.mrb[0].mxu0
  %v247 = vadd.f32 0.0, %v246
  %248 = vdwg.mxu0
  %249 = vst [vmem:[%s4] sm:$0xff] %v245
  %250 = vst [vmem:[%s4 + $0x8] sm:$0xff] %v247
  // Predicated region
  $region18: #{gcn_spatial_forward.1} parent=0 // pred_check
    _
  $region19: #{gcn_spatial_forward.1} parent=0 // pred_check_branch
    %252 = sbr.rel (0) target = $region21
  $region20: #{gcn_spatial_forward.1} parent=0 // pred_region
    _
  $region21: #{gcn_spatial_forward.1} parent=0 // pred_fallthru
    _
  // Predicated region
  $region22: #{gcn_spatial_forward.1} parent=0 // pred_check
    _
  $region23: #{gcn_spatial_forward.1} parent=0 // pred_check_branch
    %254 = sbr.rel (0) target = $region25
  $region24: #{gcn_spatial_forward.1} parent=0 // pred_region
    _
  $region25: #{gcn_spatial_forward.1} parent=0 // pred_fallthru
    _

</llo_original>
